<compile_context>
chip_gen: v6e
topology: v6e:2x2x1
jax: 0.10.0
libtpu: 0.0.40
codegen_flags: <defaults>
</compile_context>

<pallas_src>
import jax
import jax.numpy as jnp
from jax.experimental import pallas as pl
from jax.experimental.pallas import tpu as pltpu

HIDDEN = 256


def _round_up(x, m):
    return ((x + m - 1) // m) * m


def qval_kernel(x_ref, w1_ref, b1_ref, w2_ref, b2_ref, w3_ref, b3_ref, o_ref):
    # x_ref:  (TB, K_pad)   bf16   (concat([s, a]) zero-padded to K_pad lanes)
    # w1_ref: (K_pad, 256)  bf16   b1_ref: (1, 256) f32
    # w2_ref: (256, 256)    bf16   b2_ref: (1, 256) f32
    # w3_ref: (1, 256)      f32    b3_ref: (1, 1)   f32
    # o_ref:  (TB, 1)       f32
    x = x_ref[...]

    # Layer 1: single merged MXU matmul, f32 accumulation.
    # Bias + ReLU + bf16 cast fused so only a bf16 intermediate is materialized.
    h1 = jnp.maximum(
        jnp.dot(x, w1_ref[...], preferred_element_type=jnp.float32)
        + b1_ref[...], 0.0).astype(jnp.bfloat16)

    # Layer 2: bf16 MXU matmul, f32 accumulation.
    h2 = jnp.maximum(
        jnp.dot(h1, w2_ref[...], preferred_element_type=jnp.float32)
        + b2_ref[...], 0.0)

    # Layer 3: N=1 matmul replaced by a lane reduction (VPU mul + XLU reduce),
    # keeps the MXU / vector-extended push slot free.
    q = jnp.sum(h2 * w3_ref[...], axis=-1, keepdims=True) + b3_ref[...]
    o_ref[...] = q.astype(o_ref.dtype)


def prepare_params(params):
    """One-time (outside the training hot path) weight prep: merge/pad/cast."""
    w1, b1, w2, b2, w3, b3 = params
    d_in, hidden = w1.shape
    k_pad = _round_up(d_in, 32)   # clean bf16 sublane tile for the MXU weight load

    w1p = jnp.zeros((k_pad, hidden), jnp.bfloat16)
    w1p = w1p.at[:d_in].set(w1.astype(jnp.bfloat16))
    w2b = w2.astype(jnp.bfloat16)
    w3_row = jnp.reshape(w3, (1, hidden)).astype(jnp.float32)
    return (w1p,
            jnp.reshape(b1, (1, hidden)).astype(jnp.float32),
            w2b,
            jnp.reshape(b2, (1, hidden)).astype(jnp.float32),
            w3_row,
            jnp.reshape(b3, (1, 1)).astype(jnp.float32))


def qval_forward(s, a, prepared, *, block_b=4096):
    """Full Qval_net forward as one batch-tiled Pallas kernel."""
    w1p, b1, w2b, b2, w3_row, b3 = prepared
    B, d_s = s.shape
    d_a = a.shape[1]
    d_in = d_s + d_a
    k_pad, hidden = w1p.shape
    assert d_in <= k_pad

    # Batch tile: multiple of 8 sublanes, big enough to amortize the per-step
    # overhead, but capped at ceil(B/2) so the grid has >= 2 steps and v7x's
    # two TensorCores both get work via the "parallel" axis.
    tb = max(8, min(block_b, _round_up(pl.cdiv(B, 2), 8)))
    B_pad = _round_up(B, tb)
    grid = (B_pad // tb,)

    # concat([s, a]) + zero-pad K to K_pad and batch to B_pad (tiny bytes).
    x = jnp.concatenate([s.astype(jnp.bfloat16), a.astype(jnp.bfloat16)], axis=1)
    x = jnp.pad(x, ((0, B_pad - B), (0, k_pad - d_in)))
    # Padded batch rows produce garbage q (bias-driven); they are sliced off
    # below — never reduce over the batch inside the kernel.

    def full(shape):  # resident block: same block index every grid step
        return pl.BlockSpec(shape, lambda i: (0, 0))

    # Per-step VMEM working-set estimate (double-buffered I/O + intermediates),
    # with 2x headroom, clamped to a range safe on v5e / v6e / v7x.
    vmem_est = (
        2 * tb * k_pad * 2                                   # x tile (bf16, 2 bufs)
        + 2 * tb * 4                                         # out tile (f32, 2 bufs)
        + 2 * ((k_pad + hidden) * hidden * 2                 # W1, W2 (bf16)
               + 3 * hidden * 4 + 4)                         # biases / W3 row
        + tb * hidden * (2 + 4 + 4))                         # h1 bf16 + f32 accumulators
    vmem_limit = int(min(max(2 * vmem_est, 32 * 1024 * 1024), 48 * 1024 * 1024))

    flops = 2 * B_pad * (k_pad * hidden + hidden * hidden + hidden)
    bytes_accessed = (
        x.size * 2
        + (w1p.size + w2b.size) * 2
        + (b1.size + b2.size + w3_row.size + b3.size) * 4
        + B_pad * 4)

    # TODO(synk): only if profiling shows the store path exposed (most likely
    # v5e, huge B): write a lane-dense (tb/128, 128) q slab instead of (tb, 1).
    out = pl.pallas_call(
        qval_kernel,
        out_shape=jax.ShapeDtypeStruct((B_pad, 1), jnp.float32),
        grid=grid,
        in_specs=[
            pl.BlockSpec((tb, k_pad), lambda i: (i, 0)),     # x tile
            full((k_pad, hidden)),                           # W1 (resident)
            full((1, hidden)),                               # b1
            full((hidden, hidden)),                          # W2 (resident)
            full((1, hidden)),                               # b2
            full((1, hidden)),                               # W3 as a row
            full((1, 1)),                                    # b3
        ],
        out_specs=pl.BlockSpec((tb, 1), lambda i: (i, 0)),
        compiler_params=pltpu.CompilerParams(
            dimension_semantics=("parallel",),
            vmem_limit_bytes=vmem_limit),
        cost_estimate=pl.CostEstimate(
            flops=flops, transcendentals=0, bytes_accessed=bytes_accessed),
    )(x, w1p, b1, w2b, b2, w3_row, b3)

    return out[:B]


def init_params(key, input_dim, output_dim):
    """Deterministic init mimicking nn.Linear's U(-1/sqrt(fan_in), 1/sqrt(fan_in))."""
    d_in = input_dim + output_dim
    ks = jax.random.split(key, 6)

    def uniform(k, shape, fan_in):
        bound = 1.0 / jnp.sqrt(fan_in)
        return jax.random.uniform(k, shape, jnp.float32, -bound, bound)

    w1 = uniform(ks[0], (d_in, HIDDEN), d_in)
    b1 = uniform(ks[1], (1, HIDDEN), d_in)
    w2 = uniform(ks[2], (HIDDEN, HIDDEN), HIDDEN)
    b2 = uniform(ks[3], (1, HIDDEN), HIDDEN)
    w3 = uniform(ks[4], (HIDDEN, 1), HIDDEN)
    b3 = uniform(ks[5], (1, 1), HIDDEN)
    return (w1, b1, w2, b2, w3, b3)


if __name__ == "__main__":
    key = jax.random.PRNGKey(0)
    k_s, k_a, k_p, k_s2, k_a2 = jax.random.split(key, 5)

    input_dim = 16   # state dim
    output_dim = 4   # action dim

    params = init_params(k_p, input_dim, output_dim)
    prepared = prepare_params(params)   # one-time weight merge/pad/cast

    def ref_forward(s, a):
        # Pure-JAX f32 reference (kernel uses bf16 MXU inputs -> loosened tol).
        w1, b1, w2, b2, w3, b3 = params
        x = jnp.concatenate([s, a], axis=1)
        h1 = jnp.maximum(x @ w1 + b1, 0.0)
        h2 = jnp.maximum(h1 @ w2 + b2, 0.0)
        return h2 @ w3 + b3

    # Case 1: tiny batch (single grid step).
    s = jax.random.normal(k_s, (2, input_dim), jnp.float32)
    a = jax.random.normal(k_a, (2, output_dim), jnp.float32)
    q = jax.block_until_ready(qval_forward(s, a, prepared))
    assert q.shape == (2, 1), q.shape
    assert jnp.allclose(q, ref_forward(s, a), atol=5e-2, rtol=5e-2)

    # Case 2: batch not a multiple of the tile -> exercises batch padding,
    # the slice-off of padded rows, and a multi-step grid.
    s2 = jax.random.normal(k_s2, (37, input_dim), jnp.float32)
    a2 = jax.random.normal(k_a2, (37, output_dim), jnp.float32)
    q2 = jax.block_until_ready(qval_forward(s2, a2, prepared, block_b=16))
    assert q2.shape == (37, 1), q2.shape
    assert jnp.allclose(q2, ref_forward(s2, a2), atol=5e-2, rtol=5e-2)

    print("KERNEL_OK")
</pallas_src>

<mosaic_0001>
module attributes {stable_mosaic.version = 11 : i64} {
  func.func @qval_kernel(%arg0: i32, %arg1: memref<8x32xbf16, #tpu.memory_space<vmem>>, %arg2: memref<32x256xbf16, #tpu.memory_space<vmem>>, %arg3: memref<1x256xf32, #tpu.memory_space<vmem>>, %arg4: memref<256x256xbf16, #tpu.memory_space<vmem>>, %arg5: memref<1x256xf32, #tpu.memory_space<vmem>>, %arg6: memref<1x256xf32, #tpu.memory_space<vmem>>, %arg7: memref<1x1xf32, #tpu.memory_space<vmem>>, %arg8: memref<8x1xf32, #tpu.memory_space<vmem>>) attributes {dimension_semantics = [#tpu.dimension_semantics<parallel>], iteration_bounds = array<i64: 1>, scalar_prefetch = 0 : i64, scratch_operands = 0 : i64, tpu.core_type = #tpu.core_type<tc>, window_params = [{transform_indices = @transform_0, window_bounds = array<i64: 8, 32>}, {pipeline_mode = #tpu.pipeline_mode<synchronous>, transform_indices = @transform_1, window_bounds = array<i64: 32, 256>}, {pipeline_mode = #tpu.pipeline_mode<synchronous>, transform_indices = @transform_2, window_bounds = array<i64: 1, 256>}, {pipeline_mode = #tpu.pipeline_mode<synchronous>, transform_indices = @transform_3, window_bounds = array<i64: 256, 256>}, {pipeline_mode = #tpu.pipeline_mode<synchronous>, transform_indices = @transform_4, window_bounds = array<i64: 1, 256>}, {pipeline_mode = #tpu.pipeline_mode<synchronous>, transform_indices = @transform_5, window_bounds = array<i64: 1, 256>}, {pipeline_mode = #tpu.pipeline_mode<synchronous>, transform_indices = @transform_6, window_bounds = array<i64: 1, 1>}, {transform_indices = @transform_7, window_bounds = array<i64: 8, 1>}]} {
    %c0 = arith.constant 0 : index
    %c0_0 = arith.constant 0 : index
    %0 = vector.load %arg1[%c0, %c0_0] : memref<8x32xbf16, #tpu.memory_space<vmem>>, vector<8x32xbf16>
    %c0_1 = arith.constant 0 : index
    %c0_2 = arith.constant 0 : index
    %1 = vector.load %arg2[%c0_1, %c0_2] : memref<32x256xbf16, #tpu.memory_space<vmem>>, vector<32x256xbf16>
    %cst = arith.constant dense<0.000000e+00> : vector<8x256xf32>
    %2 = tpu.matmul %0, %1, %cst {dimension_numbers = #tpu.dot_dimension_numbers<[1], [0], [0], [1], [0, 0, 1, 1], [], []>} : vector<8x32xbf16>, vector<32x256xbf16>, vector<8x256xf32> -> vector<8x256xf32>
    %c0_3 = arith.constant 0 : index
    %c0_4 = arith.constant 0 : index
    %3 = vector.load %arg3[%c0_3, %c0_4] : memref<1x256xf32, #tpu.memory_space<vmem>>, vector<1x256xf32>
    %4 = vector.broadcast %3 : vector<1x256xf32> to vector<8x256xf32>
    %5 = arith.addf %2, %4 : vector<8x256xf32>
    %cst_5 = arith.constant 0.000000e+00 : f32
    %6 = vector.broadcast %cst_5 : f32 to vector<8x256xf32>
    %7 = arith.maximumf %5, %6 : vector<8x256xf32>
    %8 = arith.truncf %7 : vector<8x256xf32> to vector<8x256xbf16>
    %c0_6 = arith.constant 0 : index
    %c0_7 = arith.constant 0 : index
    %9 = vector.load %arg4[%c0_6, %c0_7] : memref<256x256xbf16, #tpu.memory_space<vmem>>, vector<256x256xbf16>
    %cst_8 = arith.constant dense<0.000000e+00> : vector<8x256xf32>
    %10 = tpu.matmul %8, %9, %cst_8 {dimension_numbers = #tpu.dot_dimension_numbers<[1], [0], [0], [1], [0, 0, 1, 1], [], []>} : vector<8x256xbf16>, vector<256x256xbf16>, vector<8x256xf32> -> vector<8x256xf32>
    %c0_9 = arith.constant 0 : index
    %c0_10 = arith.constant 0 : index
    %11 = vector.load %arg5[%c0_9, %c0_10] : memref<1x256xf32, #tpu.memory_space<vmem>>, vector<1x256xf32>
    %12 = vector.broadcast %11 : vector<1x256xf32> to vector<8x256xf32>
    %13 = arith.addf %10, %12 : vector<8x256xf32>
    %cst_11 = arith.constant 0.000000e+00 : f32
    %14 = vector.broadcast %cst_11 : f32 to vector<8x256xf32>
    %15 = arith.maximumf %13, %14 : vector<8x256xf32>
    %c0_12 = arith.constant 0 : index
    %c0_13 = arith.constant 0 : index
    %16 = vector.load %arg6[%c0_12, %c0_13] : memref<1x256xf32, #tpu.memory_space<vmem>>, vector<1x256xf32>
    %17 = vector.broadcast %16 : vector<1x256xf32> to vector<8x256xf32>
    %18 = arith.mulf %15, %17 : vector<8x256xf32>
    %cst_14 = arith.constant dense<0.000000e+00> : vector<8xf32>
    %19 = vector.multi_reduction <add>, %18, %cst_14 [1] : vector<8x256xf32> to vector<8xf32>
    %20 = vector.shape_cast %19 : vector<8xf32> to vector<8x1xf32>
    %c0_15 = arith.constant 0 : index
    %c0_16 = arith.constant 0 : index
    %21 = vector.load %arg7[%c0_15, %c0_16] : memref<1x1xf32, #tpu.memory_space<vmem>>, vector<1x1xf32>
    %22 = vector.broadcast %21 : vector<1x1xf32> to vector<8x1xf32>
    %23 = arith.addf %20, %22 : vector<8x1xf32>
    %c0_17 = arith.constant 0 : index
    %c0_18 = arith.constant 0 : index
    %24 = vector.load %arg8[%c0_17, %c0_18] : memref<8x1xf32, #tpu.memory_space<vmem>>, vector<8x1xf32>
    tpu.vector_store %arg8[%c0_17, %c0_18], %23 {strides = array<i32>} : memref<8x1xf32, #tpu.memory_space<vmem>>, vector<8x1xf32>,
    return
  }
  func.func @transform_0(%arg0: i32) -> (i32, i32) {
    %c0_i32 = arith.constant 0 : i32
    %c0_i32_0 = arith.constant 0 : i32
    return %arg0, %c0_i32 : i32, i32
  }
  func.func @transform_1(%arg0: i32) -> (i32, i32) {
    %c0_i32 = arith.constant 0 : i32
    %c0_i32_0 = arith.constant 0 : i32
    %c0_i32_1 = arith.constant 0 : i32
    return %c0_i32, %c0_i32_0 : i32, i32
  }
  func.func @transform_2(%arg0: i32) -> (i32, i32) {
    %c0_i32 = arith.constant 0 : i32
    %c0_i32_0 = arith.constant 0 : i32
    %c0_i32_1 = arith.constant 0 : i32
    return %c0_i32, %c0_i32_0 : i32, i32
  }
  func.func @transform_3(%arg0: i32) -> (i32, i32) {
    %c0_i32 = arith.constant 0 : i32
    %c0_i32_0 = arith.constant 0 : i32
    %c0_i32_1 = arith.constant 0 : i32
    return %c0_i32, %c0_i32_0 : i32, i32
  }
  func.func @transform_4(%arg0: i32) -> (i32, i32) {
    %c0_i32 = arith.constant 0 : i32
    %c0_i32_0 = arith.constant 0 : i32
    %c0_i32_1 = arith.constant 0 : i32
    return %c0_i32, %c0_i32_0 : i32, i32
  }
  func.func @transform_5(%arg0: i32) -> (i32, i32) {
    %c0_i32 = arith.constant 0 : i32
    %c0_i32_0 = arith.constant 0 : i32
    %c0_i32_1 = arith.constant 0 : i32
    return %c0_i32, %c0_i32_0 : i32, i32
  }
  func.func @transform_6(%arg0: i32) -> (i32, i32) {
    %c0_i32 = arith.constant 0 : i32
    %c0_i32_0 = arith.constant 0 : i32
    %c0_i32_1 = arith.constant 0 : i32
    return %c0_i32, %c0_i32_0 : i32, i32
  }
  func.func @transform_7(%arg0: i32) -> (i32, i32) {
    %c0_i32 = arith.constant 0 : i32
    %c0_i32_0 = arith.constant 0 : i32
    return %arg0, %c0_i32 : i32, i32
  }
}

</mosaic_0001>

<llo_original>
// kernel: tpu_custom_call.1
$region0: #{tpu_custom_call.1}
  #allocation0 [shape = 'u32[]', space=smem, size = 0x4, offset = 0x4, fixed_abs, tag = 'smem constant byte address 0x4 - core index']
  #allocation1 [shape = 'u32[144,128]{1,0:T(1,128)}', space=vmem, size = 0x12000, scoped, tag = 'internal scratch']
  #allocation2 [shape = 'f32[1,1]{1,0:T(1,128)S(1)}', space=vmem, size = 0x200, scoped, tag = 'scoped memory for tpu_custom_call.1']
  %s0 = inlined_call_operand.hbm [shape: bf16[8,32], index: 0, kind: input, shape index: {}]
  %s1 = inlined_call_operand.hbm [shape: bf16[32,256], index: 1, kind: input, shape index: {}]
  %s2 = inlined_call_operand.vmem [shape: f32[1,256], index: 2, kind: input, shape index: {}]
  %s3 = inlined_call_operand.hbm [shape: bf16[256,256], index: 3, kind: input, shape index: {}]
  %s4 = inlined_call_operand.vmem [shape: f32[1,256], index: 4, kind: input, shape index: {}]
  %s5 = inlined_call_operand.vmem [shape: f32[1,256], index: 5, kind: input, shape index: {}]
  %s6 = inlined_call_operand.<no memory space> [shape: f32[1,1], index: 6, kind: input, shape index: {}]
  %s7 = inlined_call_operand.vmem [shape: f32[8,1], index: 7, kind: output, shape index: {}]
  %s8 = sld [smem:[#allocation0]]
  $region50: #{tpu_custom_call.1} parent=0
    _
  %s10 = ssub.s32 1, %s8
  %s11 = scalar_select 0, %s10, %s8
  %v12 = vstv %s6
  %13 = vst [vmem:[#allocation2] sm:$0x1] %v12
  $region1: #{tpu_custom_call.1} parent=0
    #allocation3 [shape = 'u8[2048]{0}', space=vmem, size = 0x800, scoped, tag = 'input window, operand 0, single buffered']
    #allocation4 [shape = 's32[1]{0}', space=sflag, size = 0x4, scoped, tag = 'scoped memory for tpu_custom_call.1']
    #allocation5 [shape = 'u8[16384]{0}', space=vmem, size = 0x4000, scoped, tag = 'input window, operand 1, single buffered']
    #allocation6 [shape = 's32[1]{0}', space=sflag, size = 0x4, scoped, tag = 'scoped memory for tpu_custom_call.1']
    #allocation7 [shape = 'u8[131072]{0}', space=vmem, size = 0x20000, scoped, tag = 'input window, operand 3, single buffered']
    %14 = vsyncpa [#allocation4], 0
    %15 = vsyncpa [#allocation6], 0
    // Predicated region
    $region2: #{tpu_custom_call.1} parent=1 // pred_check
      _
    $region3: #{tpu_custom_call.1} parent=1 // pred_check_branch
      %17 = sbr.rel (0) target = $region5
    $region4: #{tpu_custom_call.1} parent=1 // pred_region
      %s19 = ssub.s32 64, 64
      %20 = vsyncadd [#allocation4], %s19
      %s22 = sshll.u32 [#allocation3], 4
      %s23 = int_to_ptr.vmem [resolvable:$true] %s22
      %25 = dma.hbm_to_vmem [thread:$0]  %s0, 64, %s23, [#allocation4]
    $region5: #{tpu_custom_call.1} parent=1 // pred_fallthru
      _
    // Predicated region
    $region6: #{tpu_custom_call.1} parent=1 // pred_check
      _
    $region7: #{tpu_custom_call.1} parent=1 // pred_check_branch
      %27 = sbr.rel (0) target = $region9
    $region8: #{tpu_custom_call.1} parent=1 // pred_region
      %s29 = ssub.s32 512, 512
      %30 = vsyncadd [#allocation6], %s29
      %s31 = sshll.u32 [#allocation5], 4
      %s32 = int_to_ptr.vmem [resolvable:$true] %s31
      %37 = dma.hbm_to_vmem [thread:$0]  %s1, 512, %s32, [#allocation6], 128, 128, 8
    $region9: #{tpu_custom_call.1} parent=1 // pred_fallthru
      _
    // Predicated region
    $region10: #{tpu_custom_call.1} parent=1 // pred_check
      _
    $region11: #{tpu_custom_call.1} parent=1 // pred_check_branch
      %39 = sbr.rel (0) target = $region13
    $region12: #{tpu_custom_call.1} parent=1 // pred_region
      _
    $region13: #{tpu_custom_call.1} parent=1 // pred_fallthru
      _
    // Predicated region
    $region14: #{tpu_custom_call.1} parent=1 // pred_check
      _
    $region15: #{tpu_custom_call.1} parent=1 // pred_check_branch
      %41 = sbr.rel (0) target = $region17
    $region16: #{tpu_custom_call.1} parent=1 // pred_region
      %s43 = ssub.s32 4096, 4096
      %44 = vsyncadd [#allocation6], %s43
      %s45 = sshll.u32 [#allocation7], 4
      %s46 = int_to_ptr.vmem [resolvable:$true] %s45
      %51 = dma.hbm_to_vmem [thread:$0]  %s3, 4096, %s46, [#allocation6], 128, 128, 8
    $region17: #{tpu_custom_call.1} parent=1 // pred_fallthru
      _
    // Predicated region
    $region18: #{tpu_custom_call.1} parent=1 // pred_check
      _
    $region19: #{tpu_custom_call.1} parent=1 // pred_check_branch
      %53 = sbr.rel (0) target = $region21
    $region20: #{tpu_custom_call.1} parent=1 // pred_region
      _
    $region21: #{tpu_custom_call.1} parent=1 // pred_fallthru
      _
    // Predicated region
    $region22: #{tpu_custom_call.1} parent=1 // pred_check
      _
    $region23: #{tpu_custom_call.1} parent=1 // pred_check_branch
      %55 = sbr.rel (0) target = $region25
    $region24: #{tpu_custom_call.1} parent=1 // pred_region
      _
    $region25: #{tpu_custom_call.1} parent=1 // pred_fallthru
      _
    // Predicated region
    $region26: #{tpu_custom_call.1} parent=1 // pred_check
      _
    $region27: #{tpu_custom_call.1} parent=1 // pred_check_branch
      %57 = sbr.rel (0) target = $region29
    $region28: #{tpu_custom_call.1} parent=1 // pred_region
      _
    $region29: #{tpu_custom_call.1} parent=1 // pred_fallthru
      _
    // Predicated region
    $region30: #{tpu_custom_call.1} parent=1 // pred_check
      _
    $region31: #{tpu_custom_call.1} parent=1 // pred_check_branch
      %59 = sbr.rel (0) target = $region33
    $region32: #{tpu_custom_call.1} parent=1 // pred_region
      %60 = dma.done [#allocation4], 64
    $region33: #{tpu_custom_call.1} parent=1 // pred_fallthru
      _
    // Predicated region
    $region34: #{tpu_custom_call.1} parent=1 // pred_check
      _
    $region35: #{tpu_custom_call.1} parent=1 // pred_check_branch
      %62 = sbr.rel (0) target = $region37
    $region36: #{tpu_custom_call.1} parent=1 // pred_region
      %63 = dma.done [#allocation6], 512
    $region37: #{tpu_custom_call.1} parent=1 // pred_fallthru
      _
    // Predicated region
    $region38: #{tpu_custom_call.1} parent=1 // pred_check
      _
    $region39: #{tpu_custom_call.1} parent=1 // pred_check_branch
      %65 = sbr.rel (0) target = $region41
    $region40: #{tpu_custom_call.1} parent=1 // pred_region
      %66 = dma.done [#allocation6], 4096
    $region41: #{tpu_custom_call.1} parent=1 // pred_fallthru
      _
    %v68 = vld [vmem:[#allocation3] sm:$0xf]
    %v69 = vld [vmem:[#allocation5] sm:$0xff]
    %v70 = vld [vmem:[#allocation5 + $0x8] sm:$0xff]
    %v71 = vld [vmem:[#allocation5 + $0x10] sm:$0xff]
    %v72 = vld [vmem:[#allocation5 + $0x18] sm:$0xff]
    %v73 = vld [vmem:[%s2] sm:$0x3]
    %v75 = vlaneseq
    %v76 = vshrl.u32 %v75, 7
    %v77 = vsub.s32 0, %v76
    %v78 = vrot.slane %v73, %v77
    %v79 = vlaneseq
    %v80 = vshrl.u32 %v79, 7
    %v81 = vsub.s32 1, %v80
    %v82 = vrot.slane %v73, %v81
    %v89 = vunpack.c.l.b16 %v69
    %v90 = vunpack.c.h.b16 %v69
    %v91 = vunpack.c.l.b16 %v70
    %v92 = vunpack.c.h.b16 %v70
    %v93 = vunpack.c.l.b16 %v71
    %v94 = vunpack.c.h.b16 %v71
    %v95 = vunpack.c.l.b16 %v72
    %v96 = vunpack.c.h.b16 %v72
    %v97 = vpack.c.b16 %v91, %v89
    %v98 = vpack.c.b16 %v92, %v90
    %v99 = vpack.c.b16 %v95, %v93
    %v100 = vpack.c.b16 %v96, %v94
    %vm105 = vcmask 261120
    %v107 = vsel %vm105, %v68, 0
    %109 = vmatprep.subr.bf16.mxu0 0
    %110 = vmatpush1.bf16.msra.mxu0 0
    %111 = vmatprep.subr.bf16.mxu0 0
    %112 = vmatpush1.bf16.msra.mxu0 0
    %113 = vmatprep.subr.bf16.mxu0 0
    %114 = vmatpush1.bf16.msra.mxu0 0
    %115 = vmatprep.subr.bf16.mxu0 0
    %116 = vmatpush1.bf16.msra.mxu0 0
    %117 = vmatprep.subr.bf16.mxu0 0
    %118 = vmatpush1.bf16.msra.mxu0 0
    %119 = vmatprep.subr.bf16.mxu0 0
    %120 = vmatpush1.bf16.msra.mxu0 0
    %121 = vmatprep.subr.bf16.mxu0 %v100
    %122 = vmatpush1.bf16.msra.mxu0 %v99
    %123 = vmatprep.subr.bf16.mxu0 %v98
    %124 = vmatpush1.bf16.msra.mxu0 %v97
    %125 = vmatprep.subr.bf16.mxu0 0
    %126 = vmatpush2.bf16.msra.mxu0 0
    %127 = vmatprep.subr.bf16.mxu0 0
    %128 = vmatpush2.bf16.msra.mxu0 0
    %129 = vmatprep.subr.bf16.mxu0 0
    %130 = vmatpush2.bf16.msra.mxu0 0
    %131 = vmatprep.subr.bf16.mxu0 0
    %132 = vmatpush2.bf16.msra.mxu0 0
    %133 = vmatprep.subr.bf16.mxu0 0
    %134 = vmatpush2.bf16.msra.mxu0 0
    %135 = vmatprep.subr.bf16.mxu0 0
    %136 = vmatpush2.bf16.msra.mxu0 0
    %137 = vmatprep.subr.bf16.mxu0 0
    %138 = vmatpush2.bf16.msra.mxu0 0
    %139 = vmatprep.subr.bf16.mxu0 0
    %140 = vmatpush2.bf16.msra.mxu0 0
    %141 = vmatprep.mubr.bf16.mxu0 0
    %142 = vmatmul.mubr.bf16.gmra.mxu0 %v107
    %v143 = vpop.f32.mrf.mxu0
    %v144 = vadd.f32 %v78, %v143
    %v145 = vpop.f32.mrf.mxu0
    %v146 = vadd.f32 %v82, %v145
    %v147 = vpop.f32.mrf.mxu0
    %v148 = vpop.f32.mrf.mxu0
    %149 = vdwg.mxu0
    %v150 = vmax.f32 %v144, 0.0
    %v151 = vmax.f32 %v146, 0.0
    %v152 = vpack.c.bf16 %v150, %v150
    %v153 = vpack.c.bf16 %v151, %v151
    %v154 = vld [vmem:[#allocation7] sm:$0xff]
    %v155 = vld [vmem:[#allocation7 + $0x8] sm:$0xff]
    %v156 = vld [vmem:[#allocation7 + $0x10] sm:$0xff]
    %v157 = vld [vmem:[#allocation7 + $0x18] sm:$0xff]
    %v158 = vld [vmem:[#allocation7 + $0x20] sm:$0xff]
    %v159 = vld [vmem:[#allocation7 + $0x28] sm:$0xff]
    %v160 = vld [vmem:[#allocation7 + $0x30] sm:$0xff]
    %v161 = vld [vmem:[#allocation7 + $0x38] sm:$0xff]
    %v162 = vld [vmem:[#allocation7 + $0x40] sm:$0xff]
    %v163 = vld [vmem:[#allocation7 + $0x48] sm:$0xff]
    %v164 = vld [vmem:[#allocation7 + $0x50] sm:$0xff]
    %v165 = vld [vmem:[#allocation7 + $0x58] sm:$0xff]
    %v166 = vld [vmem:[#allocation7 + $0x60] sm:$0xff]
    %v167 = vld [vmem:[#allocation7 + $0x68] sm:$0xff]
    %v168 = vld [vmem:[#allocation7 + $0x70] sm:$0xff]
    %v169 = vld [vmem:[#allocation7 + $0x78] sm:$0xff]
    %v170 = vld [vmem:[#allocation7 + $0x80] sm:$0xff]
    %v171 = vld [vmem:[#allocation7 + $0x88] sm:$0xff]
    %v172 = vld [vmem:[#allocation7 + $0x90] sm:$0xff]
    %v173 = vld [vmem:[#allocation7 + $0x98] sm:$0xff]
    %v174 = vld [vmem:[#allocation7 + $0xa0] sm:$0xff]
    %v175 = vld [vmem:[#allocation7 + $0xa8] sm:$0xff]
    %v176 = vld [vmem:[#allocation7 + $0xb0] sm:$0xff]
    %v177 = vld [vmem:[#allocation7 + $0xb8] sm:$0xff]
    %v178 = vld [vmem:[#allocation7 + $0xc0] sm:$0xff]
    %v179 = vld [vmem:[#allocation7 + $0xc8] sm:$0xff]
    %v180 = vld [vmem:[#allocation7 + $0xd0] sm:$0xff]
    %v181 = vld [vmem:[#allocation7 + $0xd8] sm:$0xff]
    %v182 = vld [vmem:[#allocation7 + $0xe0] sm:$0xff]
    %v183 = vld [vmem:[#allocation7 + $0xe8] sm:$0xff]
    %v184 = vld [vmem:[#allocation7 + $0xf0] sm:$0xff]
    %v185 = vld [vmem:[#allocation7 + $0xf8] sm:$0xff]
    %v186 = vld [vmem:[%s4] sm:$0x3]
    %v188 = vlaneseq
    %v189 = vshrl.u32 %v188, 7
    %v190 = vsub.s32 0, %v189
    %v191 = vrot.slane %v186, %v190
    %v192 = vlaneseq
    %v193 = vshrl.u32 %v192, 7
    %v194 = vsub.s32 1, %v193
    %v195 = vrot.slane %v186, %v194
    %v230 = vunpack.c.l.b16 %v154
    %v231 = vunpack.c.h.b16 %v154
    %v232 = vunpack.c.l.b16 %v155
    %v233 = vunpack.c.h.b16 %v155
    %v234 = vunpack.c.l.b16 %v156
    %v235 = vunpack.c.h.b16 %v156
    %v236 = vunpack.c.l.b16 %v157
    %v237 = vunpack.c.h.b16 %v157
    %v238 = vunpack.c.l.b16 %v158
    %v239 = vunpack.c.h.b16 %v158
    %v240 = vunpack.c.l.b16 %v159
    %v241 = vunpack.c.h.b16 %v159
    %v242 = vunpack.c.l.b16 %v160
    %v243 = vunpack.c.h.b16 %v160
    %v244 = vunpack.c.l.b16 %v161
    %v245 = vunpack.c.h.b16 %v161
    %v246 = vunpack.c.l.b16 %v162
    %v247 = vunpack.c.h.b16 %v162
    %v248 = vunpack.c.l.b16 %v163
    %v249 = vunpack.c.h.b16 %v163
    %v250 = vunpack.c.l.b16 %v164
    %v251 = vunpack.c.h.b16 %v164
    %v252 = vunpack.c.l.b16 %v165
    %v253 = vunpack.c.h.b16 %v165
    %v254 = vunpack.c.l.b16 %v166
    %v255 = vunpack.c.h.b16 %v166
    %v256 = vunpack.c.l.b16 %v167
    %v257 = vunpack.c.h.b16 %v167
    %v258 = vunpack.c.l.b16 %v168
    %v259 = vunpack.c.h.b16 %v168
    %v260 = vunpack.c.l.b16 %v169
    %v261 = vunpack.c.h.b16 %v169
    %v262 = vunpack.c.l.b16 %v170
    %v263 = vunpack.c.h.b16 %v170
    %v264 = vunpack.c.l.b16 %v171
    %v265 = vunpack.c.h.b16 %v171
    %v266 = vunpack.c.l.b16 %v172
    %v267 = vunpack.c.h.b16 %v172
    %v268 = vunpack.c.l.b16 %v173
    %v269 = vunpack.c.h.b16 %v173
    %v270 = vunpack.c.l.b16 %v174
    %v271 = vunpack.c.h.b16 %v174
    %v272 = vunpack.c.l.b16 %v175
    %v273 = vunpack.c.h.b16 %v175
    %v274 = vunpack.c.l.b16 %v176
    %v275 = vunpack.c.h.b16 %v176
    %v276 = vunpack.c.l.b16 %v177
    %v277 = vunpack.c.h.b16 %v177
    %v278 = vunpack.c.l.b16 %v178
    %v279 = vunpack.c.h.b16 %v178
    %v280 = vunpack.c.l.b16 %v179
    %v281 = vunpack.c.h.b16 %v179
    %v282 = vunpack.c.l.b16 %v180
    %v283 = vunpack.c.h.b16 %v180
    %v284 = vunpack.c.l.b16 %v181
    %v285 = vunpack.c.h.b16 %v181
    %v286 = vunpack.c.l.b16 %v182
    %v287 = vunpack.c.h.b16 %v182
    %v288 = vunpack.c.l.b16 %v183
    %v289 = vunpack.c.h.b16 %v183
    %v290 = vunpack.c.l.b16 %v184
    %v291 = vunpack.c.h.b16 %v184
    %v292 = vunpack.c.l.b16 %v185
    %v293 = vunpack.c.h.b16 %v185
    %v294 = vpack.c.b16 %v232, %v230
    %v295 = vpack.c.b16 %v233, %v231
    %v296 = vpack.c.b16 %v236, %v234
    %v297 = vpack.c.b16 %v237, %v235
    %v298 = vpack.c.b16 %v240, %v238
    %v299 = vpack.c.b16 %v241, %v239
    %v300 = vpack.c.b16 %v244, %v242
    %v301 = vpack.c.b16 %v245, %v243
    %v302 = vpack.c.b16 %v248, %v246
    %v303 = vpack.c.b16 %v249, %v247
    %v304 = vpack.c.b16 %v252, %v250
    %v305 = vpack.c.b16 %v253, %v251
    %v306 = vpack.c.b16 %v256, %v254
    %v307 = vpack.c.b16 %v257, %v255
    %v308 = vpack.c.b16 %v260, %v258
    %v309 = vpack.c.b16 %v261, %v259
    %v310 = vpack.c.b16 %v264, %v262
    %v311 = vpack.c.b16 %v265, %v263
    %v312 = vpack.c.b16 %v268, %v266
    %v313 = vpack.c.b16 %v269, %v267
    %v314 = vpack.c.b16 %v272, %v270
    %v315 = vpack.c.b16 %v273, %v271
    %v316 = vpack.c.b16 %v276, %v274
    %v317 = vpack.c.b16 %v277, %v275
    %v318 = vpack.c.b16 %v280, %v278
    %v319 = vpack.c.b16 %v281, %v279
    %v320 = vpack.c.b16 %v284, %v282
    %v321 = vpack.c.b16 %v285, %v283
    %v322 = vpack.c.b16 %v288, %v286
    %v323 = vpack.c.b16 %v289, %v287
    %v324 = vpack.c.b16 %v292, %v290
    %v325 = vpack.c.b16 %v293, %v291
    %358 = vmatprep.subr.bf16.mxu0 %v309
    %359 = vmatpush1.bf16.msra.mxu0 %v308
    %360 = vmatprep.subr.bf16.mxu0 %v307
    %361 = vmatpush1.bf16.msra.mxu0 %v306
    %362 = vmatprep.subr.bf16.mxu0 %v305
    %363 = vmatpush1.bf16.msra.mxu0 %v304
    %364 = vmatprep.subr.bf16.mxu0 %v303
    %365 = vmatpush1.bf16.msra.mxu0 %v302
    %366 = vmatprep.subr.bf16.mxu0 %v301
    %367 = vmatpush1.bf16.msra.mxu0 %v300
    %368 = vmatprep.subr.bf16.mxu0 %v299
    %369 = vmatpush1.bf16.msra.mxu0 %v298
    %370 = vmatprep.subr.bf16.mxu0 %v297
    %371 = vmatpush1.bf16.msra.mxu0 %v296
    %372 = vmatprep.subr.bf16.mxu0 %v295
    %373 = vmatpush1.bf16.msra.mxu0 %v294
    %374 = vmatprep.subr.bf16.mxu0 %v325
    %375 = vmatpush2.bf16.msra.mxu0 %v324
    %376 = vmatprep.subr.bf16.mxu0 %v323
    %377 = vmatpush2.bf16.msra.mxu0 %v322
    %378 = vmatprep.subr.bf16.mxu0 %v321
    %379 = vmatpush2.bf16.msra.mxu0 %v320
    %380 = vmatprep.subr.bf16.mxu0 %v319
    %381 = vmatpush2.bf16.msra.mxu0 %v318
    %382 = vmatprep.subr.bf16.mxu0 %v317
    %383 = vmatpush2.bf16.msra.mxu0 %v316
    %384 = vmatprep.subr.bf16.mxu0 %v315
    %385 = vmatpush2.bf16.msra.mxu0 %v314
    %386 = vmatprep.subr.bf16.mxu0 %v313
    %387 = vmatpush2.bf16.msra.mxu0 %v312
    %388 = vmatprep.subr.bf16.mxu0 %v311
    %389 = vmatpush2.bf16.msra.mxu0 %v310
    %390 = vmatprep.mubr.bf16.mxu0 %v153
    %391 = vmatmul.mubr.bf16.gmra.mxu0 %v152
    %v392 = vpop.f32.mrf.mxu0
    %v393 = vadd.f32 %v191, %v392
    %v394 = vpop.f32.mrf.mxu0
    %v395 = vadd.f32 %v195, %v394
    %v396 = vpop.f32.mrf.mxu0
    %v397 = vpop.f32.mrf.mxu0
    %398 = vdwg.mxu0
    %v399 = vmax.f32 %v393, 0.0
    %v400 = vmax.f32 %v395, 0.0
    %v401 = vld [vmem:[%s5] sm:$0x3]
    %v403 = vlaneseq
    %v404 = vshrl.u32 %v403, 7
    %v405 = vsub.s32 0, %v404
    %v406 = vrot.slane %v401, %v405
    %v407 = vlaneseq
    %v408 = vshrl.u32 %v407, 7
    %v409 = vsub.s32 1, %v408
    %v410 = vrot.slane %v401, %v409
    %v413 = vmul.f32 %v399, %v406
    %v414 = vmul.f32 %v400, %v410
    %v415 = vadd.f32 %v413, %v414
    %416 = vadd.xlane.f32.xlu0 %v415
    %v417 = vpop.xlane.xlu0 %416
    %v418 = vld [vmem:[#allocation2] sm:$0x1]
    %v420 = vlaneseq
    %v421 = vshrl.u32 %v420, 7
    %v422 = vsub.s32 0, %v421
    %v423 = vrot.slane %v418, %v422
    %v425 = vadd.f32 %v417, %v423
    %vm426 = vcmask 7168
    %427 = vst.msk [vmem:[%s7] sm:$0xff] %vm426, %v425
    // Predicated region
    $region42: #{tpu_custom_call.1} parent=1 // pred_check
      _
    $region43: #{tpu_custom_call.1} parent=1 // pred_check_branch
      %429 = sbr.rel (0) target = $region45
    $region44: #{tpu_custom_call.1} parent=1 // pred_region
      _
    $region45: #{tpu_custom_call.1} parent=1 // pred_fallthru
      _
    // Predicated region
    $region46: #{tpu_custom_call.1} parent=1 // pred_check
      _
    $region47: #{tpu_custom_call.1} parent=1 // pred_check_branch
      %431 = sbr.rel (0) target = $region49
    $region48: #{tpu_custom_call.1} parent=1 // pred_region
      _
    $region49: #{tpu_custom_call.1} parent=1 // pred_fallthru
      _
    %432 = vsyncpa [#allocation4], 1
    %433 = vsyncpa [#allocation6], 1

</llo_original>
